<compile_context>
chip_gen: v7x
topology: tpu7x:2x2x1
jax: 0.10.0
libtpu: 0.0.40
codegen_flags: <defaults>
</compile_context>

<pallas_src>
import functools
import math

import jax
import jax.numpy as jnp
from jax.experimental import pallas as pl
from jax.experimental.pallas import tpu as pltpu

_LANE = 128
# ~2 MiB per tile buffer: with double-buffered input + output (4 live buffers)
# this stays well under v5e's 16 MiB scoped-VMEM default and v7x's 32 MiB.
_TARGET_TILE_BYTES = 2 * 1024 * 1024


def _drop_path_kernel(u_ref, x_ref, o_ref, *, keep_prob):
    # u_ref: (rows, 1) f32 per-row uniforms (loop-invariant across the grid).
    # x_ref / o_ref: (rows, tile_n) lane-dense tile of the flattened input.
    u = u_ref[...]                                      # tiny, stays f32
    mask = jnp.floor(keep_prob + u)                     # 0.0 / 1.0 per row
    scale = (mask * (1.0 / keep_prob)).astype(x_ref.dtype)
    o_ref[...] = x_ref[...] * scale                     # multiply in input dtype


def drop_path(x, drop_prob: float = 0.0, training: bool = False, *, key=None,
              tile_lanes=None):
    """Pallas DropPath. x is NCHW (or any rank >= 1; mask is per leading dim)."""
    if drop_prob == 0.0 or not training:
        return x
    if key is None:
        # No silent PRNGKey(0) default: identical masks every call would be a
        # silent training-quality bug.
        raise ValueError(
            "drop_path requires an explicit PRNG `key` when training with "
            "drop_prob > 0.")

    keep_prob = 1.0 - drop_prob
    B = int(x.shape[0])
    N = 1
    for d in x.shape[1:]:
        N *= int(d)
    N = max(N, 1)

    # Per-sample uniforms (matches torch.rand((B,1,...,1)) semantics; the exact
    # RNG stream differs from torch).
    u = jax.random.uniform(key, (B, 1), dtype=jnp.float32)

    # Pack small batches onto sublanes so a 2-row block isn't padded to 8 rows.
    R = 1
    if B < 8:
        cand = 8 // math.gcd(8, B)          # smallest R with (B * R) % 8 == 0
        if N % cand == 0:
            R = cand
    rows = B * R
    cols = N // R
    u_rows = jnp.repeat(u, R, axis=0) if R > 1 else u   # (rows, 1)

    x2 = x.reshape(rows, cols)
    itemsize = jnp.dtype(x.dtype).itemsize

    # Lane-dense tiling along the feature axis.
    if tile_lanes is not None:
        tile_n = min(cols, int(tile_lanes))
    elif cols % _LANE == 0:
        budget = max(_LANE,
                     (_TARGET_TILE_BYTES // (rows * itemsize)) // _LANE * _LANE)
        tile_n = min(cols, budget)
    else:
        # Not lane-aligned: fall back to one full-width block (valid BlockSpec:
        # block dim equals the full array dim).
        tile_n = cols
    grid = (pl.cdiv(cols, tile_n),)

    out2 = pl.pallas_call(
        functools.partial(_drop_path_kernel, keep_prob=keep_prob),
        out_shape=jax.ShapeDtypeStruct((rows, cols), x.dtype),
        grid=grid,
        in_specs=[
            # Constant block index -> fetched once, reused across the grid.
            pl.BlockSpec((rows, 1), lambda j: (0, 0)),
            pl.BlockSpec((rows, tile_n), lambda j: (0, j)),
        ],
        out_specs=pl.BlockSpec((rows, tile_n), lambda j: (0, j)),
        compiler_params=pltpu.CompilerParams(
            dimension_semantics=("parallel",)),
    )(u_rows, x2)

    return out2.reshape(x.shape)


class DropPath:
    """Drop paths (Stochastic Depth) per sample, Pallas-backed."""

    def __init__(self, drop_prob=None):
        self.drop_prob = drop_prob if drop_prob is not None else 0.0
        self.training = True

    def __call__(self, x, *, key=None):
        return drop_path(x, self.drop_prob, self.training, key=key)


if __name__ == "__main__":
    key = jax.random.PRNGKey(0)
    kx, ku = jax.random.split(key)

    B, C, H, W = 2, 4, 16, 16
    x = jax.random.normal(kx, (B, C, H, W), dtype=jnp.float32)

    drop_prob = 0.3
    keep_prob = 1.0 - drop_prob

    module = DropPath(drop_prob)
    module.training = True
    out = jax.block_until_ready(module(x, key=ku))

    # Pure-JAX reference with the same randoms.
    u = jax.random.uniform(ku, (B, 1), dtype=jnp.float32)
    mask = jnp.floor(keep_prob + u).reshape(B, 1, 1, 1)
    ref = x / keep_prob * mask

    assert out.shape == x.shape and out.dtype == x.dtype
    assert jnp.allclose(out, ref, atol=1e-6, rtol=1e-6)

    # Exercise the grid > 1 tiled path explicitly with a small tile.
    out_tiled = jax.block_until_ready(
        drop_path(x, drop_prob, True, key=ku, tile_lanes=128))
    assert jnp.allclose(out_tiled, ref, atol=1e-6, rtol=1e-6)

    # bf16 path: the big multiply stays in the input dtype.
    xb = x.astype(jnp.bfloat16)
    out_bf16 = jax.block_until_ready(drop_path(xb, drop_prob, True, key=ku))
    ref_bf16 = xb * (mask / keep_prob).astype(jnp.bfloat16)
    assert out_bf16.dtype == jnp.bfloat16
    assert jnp.allclose(out_bf16.astype(jnp.float32),
                        ref_bf16.astype(jnp.float32), atol=1e-2, rtol=1e-2)

    # Eval mode / zero prob is identity.
    module.training = False
    out_eval = jax.block_until_ready(module(x, key=ku))
    assert jnp.array_equal(out_eval, x)

    print("KERNEL_OK")
</pallas_src>

<mosaic_0001>
module attributes {stable_mosaic.version = 11 : i64} {
  func.func @_drop_path_kernel(%arg0: i32, %arg1: memref<8x1xf32, #tpu.memory_space<vmem>>, %arg2: memref<8x256xf32, #tpu.memory_space<vmem>>, %arg3: memref<8x256xf32, #tpu.memory_space<vmem>>) attributes {dimension_semantics = [#tpu.dimension_semantics<parallel>], iteration_bounds = array<i64: 1>, scalar_prefetch = 0 : i64, scratch_operands = 0 : i64, tpu.core_type = #tpu.core_type<tc>, window_params = [{pipeline_mode = #tpu.pipeline_mode<synchronous>, transform_indices = @transform_0, window_bounds = array<i64: 8, 1>}, {transform_indices = @transform_1, window_bounds = array<i64: 8, 256>}, {transform_indices = @transform_2, window_bounds = array<i64: 8, 256>}]} {
    %c0 = arith.constant 0 : index
    %c0_0 = arith.constant 0 : index
    %0 = vector.load %arg1[%c0, %c0_0] : memref<8x1xf32, #tpu.memory_space<vmem>>, vector<8x1xf32>
    %cst = arith.constant 0.699999988 : f32
    %1 = vector.broadcast %cst : f32 to vector<8x1xf32>
    %2 = arith.addf %1, %0 : vector<8x1xf32>
    %3 = math.floor %2 : vector<8x1xf32>
    %cst_1 = arith.constant 1.42857146 : f32
    %4 = vector.broadcast %cst_1 : f32 to vector<8x1xf32>
    %5 = arith.mulf %3, %4 : vector<8x1xf32>
    %c0_2 = arith.constant 0 : index
    %c0_3 = arith.constant 0 : index
    %6 = vector.load %arg2[%c0_2, %c0_3] : memref<8x256xf32, #tpu.memory_space<vmem>>, vector<8x256xf32>
    %7 = vector.broadcast %5 : vector<8x1xf32> to vector<8x256xf32>
    %8 = arith.mulf %6, %7 : vector<8x256xf32>
    %c0_4 = arith.constant 0 : index
    %c0_5 = arith.constant 0 : index
    %9 = vector.load %arg3[%c0_4, %c0_5] : memref<8x256xf32, #tpu.memory_space<vmem>>, vector<8x256xf32>
    tpu.vector_store %arg3[%c0_4, %c0_5], %8 {strides = array<i32>} : memref<8x256xf32, #tpu.memory_space<vmem>>, vector<8x256xf32>,
    return
  }
  func.func @transform_0(%arg0: i32) -> (i32, i32) {
    %c0_i32 = arith.constant 0 : i32
    %c0_i32_0 = arith.constant 0 : i32
    %c0_i32_1 = arith.constant 0 : i32
    return %c0_i32, %c0_i32_0 : i32, i32
  }
  func.func @transform_1(%arg0: i32) -> (i32, i32) {
    %c0_i32 = arith.constant 0 : i32
    %c0_i32_0 = arith.constant 0 : i32
    return %c0_i32, %arg0 : i32, i32
  }
  func.func @transform_2(%arg0: i32) -> (i32, i32) {
    %c0_i32 = arith.constant 0 : i32
    %c0_i32_0 = arith.constant 0 : i32
    return %c0_i32, %arg0 : i32, i32
  }
}

</mosaic_0001>

<llo_original>
// kernel: tpu_custom_call.1
$region0: #{tpu_custom_call.1}
  #allocation0 [shape = 'u32[]', space=smem, size = 0x4, offset = 0x4, fixed_abs, tag = 'smem constant byte address 0x4 - core index']
  #allocation1 [shape = 'u32[144,128]{1,0:T(1,128)}', space=vmem, size = 0x12000, scoped, tag = 'internal scratch']
  %s0 = inlined_call_operand.vmem [shape: f32[8,1], index: 0, kind: input, shape index: {}]
  %s1 = inlined_call_operand.hbm [shape: f32[8,256], index: 1, kind: input, shape index: {}]
  %s2 = inlined_call_operand.hbm [shape: f32[8,256], index: 2, kind: output, shape index: {}]
  %s3 = sld [smem:[#allocation0]]
  $region22: #{tpu_custom_call.1} parent=0
    _
  %s5 = ssub.s32 1, %s3
  %s6 = scalar_select 0, %s5, %s3
  $region1: #{tpu_custom_call.1} parent=0
    #allocation2 [shape = 'u8[8192]{0}', space=vmem, size = 0x2000, scoped, tag = 'input window, operand 1, single buffered']
    #allocation3 [shape = 's32[1]{0}', space=sflag, size = 0x4, scoped, tag = 'scoped memory for tpu_custom_call.1']
    #allocation4 [shape = 's32[1]{0}', space=sflag, size = 0x4, scoped, tag = 'scoped memory for tpu_custom_call.1']
    #allocation5 [shape = 'u8[8192]{0}', space=vmem, size = 0x2000, scoped, tag = 'output window, operand 0, single buffered']
    %7 = vsyncpa [#allocation3], 0
    %8 = vsyncpa [#allocation4], 0
    // Predicated region
    $region2: #{tpu_custom_call.1} parent=1 // pred_check
      _
    $region3: #{tpu_custom_call.1} parent=1 // pred_check_branch
      %10 = sbr.rel (0) target = $region5
    $region4: #{tpu_custom_call.1} parent=1 // pred_region
      _
    $region5: #{tpu_custom_call.1} parent=1 // pred_fallthru
      _
    // Predicated region
    $region6: #{tpu_custom_call.1} parent=1 // pred_check
      _
    $region7: #{tpu_custom_call.1} parent=1 // pred_check_branch
      %12 = sbr.rel (0) target = $region9
    $region8: #{tpu_custom_call.1} parent=1 // pred_region
      %s14 = ssub.s32 256, 256
      %15 = vsyncadd [#allocation3], %s14
      %s17 = sshll.u32 [#allocation2], 4
      %s18 = int_to_ptr.vmem [resolvable:$true] %s17
      %20 = dma.hbm_to_vmem [thread:$0]  %s1, 256, %s18, [#allocation3]
    $region9: #{tpu_custom_call.1} parent=1 // pred_fallthru
      _
    // Predicated region
    $region10: #{tpu_custom_call.1} parent=1 // pred_check
      _
    $region11: #{tpu_custom_call.1} parent=1 // pred_check_branch
      %22 = sbr.rel (0) target = $region13
    $region12: #{tpu_custom_call.1} parent=1 // pred_region
      %23 = dma.done [#allocation3], 256
    $region13: #{tpu_custom_call.1} parent=1 // pred_fallthru
      _
    %v24 = vld [vmem:[%s0] sm:$0xff]
    %v25 = vadd.f32 %v24, 0.7
    %v26 = vfloor.f32 %v25
    %v27 = vmul.f32 %v26, 1.4285715
    %v28 = vld [vmem:[#allocation2] sm:$0xff]
    %v29 = vld [vmem:[#allocation2 + $0x8] sm:$0xff]
    %31 = vset.pattern.permute.xlu0 0
    %32 = vperm.xlu0 %31, %v27
    %v33 = vpop.permute.xlu0 %32
    %v35 = vmul.f32 %v28, %v33
    %v36 = vmul.f32 %v29, %v33
    %37 = vst [vmem:[#allocation5] sm:$0xff] %v35
    %38 = vst [vmem:[#allocation5 + $0x8] sm:$0xff] %v36
    // Predicated region
    $region14: #{tpu_custom_call.1} parent=1 // pred_check
      _
    $region15: #{tpu_custom_call.1} parent=1 // pred_check_branch
      %40 = sbr.rel (0) target = $region17
    $region16: #{tpu_custom_call.1} parent=1 // pred_region
      %s42 = ssub.s32 256, 256
      %43 = vsyncadd [#allocation4], %s42
      %s45 = sshll.u32 [#allocation5], 4
      %s46 = int_to_ptr.vmem [resolvable:$true] %s45
      %48 = dma.vmem_to_hbm [thread:$0]  %s46, 256, %s2, [#allocation4]
    $region17: #{tpu_custom_call.1} parent=1 // pred_fallthru
      _
    // Predicated region
    $region18: #{tpu_custom_call.1} parent=1 // pred_check
      _
    $region19: #{tpu_custom_call.1} parent=1 // pred_check_branch
      %50 = sbr.rel (0) target = $region21
    $region20: #{tpu_custom_call.1} parent=1 // pred_region
      %51 = dma.done [#allocation4], 256
    $region21: #{tpu_custom_call.1} parent=1 // pred_fallthru
      _
    %52 = vsyncpa [#allocation3], 1
    %53 = vsyncpa [#allocation4], 1

</llo_original>
